<compile_context>
chip_gen: v5e
topology: v5e:2x2
jax: 0.10.0
libtpu: 0.0.40
codegen_flags: <defaults>
</compile_context>

<pallas_src>
import functools

import jax
import jax.numpy as jnp
from jax.experimental import pallas as pl
from jax.experimental.pallas import tpu as pltpu


LOG_STD_MIN = -20.0
LOG_STD_MAX = 2.0


def _actor_kernel(x_ref,
                  w1_ref, b1_ref,
                  w2_ref, b2_ref,
                  wh_ref, bh_ref,
                  out_ref, *, action_dim):
    # fc1 + relu  (bf16 MXU inputs, f32 accumulate, f32 elementwise)
    h1 = jnp.dot(x_ref[...].astype(jnp.bfloat16), w1_ref[...],
                 preferred_element_type=jnp.float32)
    h1 = jnp.maximum(h1 + b1_ref[...], 0.0)

    # fc2 + relu
    h2 = jnp.dot(h1.astype(jnp.bfloat16), w2_ref[...],
                 preferred_element_type=jnp.float32)
    h2 = jnp.maximum(h2 + b2_ref[...], 0.0)

    # Fused heads: columns [0, A) = mean, [A, 2A) = log_std, rest = zero pad.
    heads = jnp.dot(h2.astype(jnp.bfloat16), wh_ref[...],
                    preferred_element_type=jnp.float32) + bh_ref[...]

    # Clamp only the log_std columns (cheap VPU select on the lane index).
    col = jax.lax.broadcasted_iota(jnp.int32, heads.shape, 1)
    is_log_std = (col >= action_dim) & (col < 2 * action_dim)
    heads = jnp.where(is_log_std,
                      jnp.clip(heads, LOG_STD_MIN, LOG_STD_MAX),
                      heads)

    out_ref[...] = heads.astype(out_ref.dtype)


def prepare_actor_params(params):
    """One-time param prep: fuse + zero-pad the two heads to a 128-lane-dense
    weight and cast matmul weights to bf16 (biases stay f32)."""
    action_dim = params["wm"].shape[1]
    head_cols = 2 * action_dim
    head_out = max(128, pl.cdiv(head_cols, 128) * 128)   # lane-dense output width

    wh = jnp.zeros((params["wm"].shape[0], head_out), jnp.float32)
    wh = wh.at[:, :action_dim].set(params["wm"])
    wh = wh.at[:, action_dim:head_cols].set(params["ws"])
    bh = jnp.zeros((1, head_out), jnp.float32)
    bh = bh.at[:, :action_dim].set(params["bm"])
    bh = bh.at[:, action_dim:head_cols].set(params["bs"])

    return dict(
        w1=params["w1"].astype(jnp.bfloat16),
        b1=params["b1"],
        w2=params["w2"].astype(jnp.bfloat16),
        b2=params["b2"],
        wh=wh.astype(jnp.bfloat16),
        bh=bh,
        action_dim=action_dim,
        head_out=head_out,
    )


def actor_forward(state, prep, *, batch_tile=512):
    """Fused Actor forward pass.

    state: [B, state_dim] float32
    prep:  output of prepare_actor_params()
    returns: (mean [B, action_dim], log_std [B, action_dim])
    """
    B, state_dim = state.shape
    action_dim = prep["action_dim"]
    head_out = prep["head_out"]
    w1, b1 = prep["w1"], prep["b1"]
    w2, b2 = prep["w2"], prep["b2"]
    wh, bh = prep["wh"], prep["bh"]

    # Batch tile: full batch if small, otherwise a sublane-aligned tile that is
    # comfortably within v7x's 64 MiB VMEM (weights stay resident across steps).
    tb = B if B <= batch_tile else max(8, (batch_tile // 8) * 8)
    grid = (pl.cdiv(B, tb),)

    kernel = functools.partial(_actor_kernel, action_dim=action_dim)

    heads = pl.pallas_call(
        kernel,
        out_shape=jax.ShapeDtypeStruct((B, head_out), jnp.float32),
        grid=grid,
        in_specs=[
            pl.BlockSpec((tb, state_dim), lambda i: (i, 0)),   # state: tiled over batch
            pl.BlockSpec(w1.shape, lambda i: (0, 0)),          # weights: VMEM-resident
            pl.BlockSpec(b1.shape, lambda i: (0, 0)),
            pl.BlockSpec(w2.shape, lambda i: (0, 0)),
            pl.BlockSpec(b2.shape, lambda i: (0, 0)),
            pl.BlockSpec(wh.shape, lambda i: (0, 0)),
            pl.BlockSpec(bh.shape, lambda i: (0, 0)),
        ],
        out_specs=pl.BlockSpec((tb, head_out), lambda i: (i, 0)),
        compiler_params=pltpu.CompilerParams(
            dimension_semantics=("parallel",)),
    )(state, w1, b1, w2, b2, wh, bh)

    mean = heads[:, :action_dim]
    log_std = heads[:, action_dim:2 * action_dim]
    return mean, log_std


def init_actor_params(key, state_dim, action_dim):
    """Deterministic init mimicking PyTorch nn.Linear default
    (U[-1/sqrt(fan_in), 1/sqrt(fan_in)]); weights stored as [in, out]."""
    def linear(key, fan_in, fan_out):
        kw, kb = jax.random.split(key)
        bound = 1.0 / jnp.sqrt(fan_in)
        w = jax.random.uniform(kw, (fan_in, fan_out), jnp.float32, -bound, bound)
        b = jax.random.uniform(kb, (1, fan_out), jnp.float32, -bound, bound)
        return w, b

    k1, k2, k3, k4 = jax.random.split(key, 4)
    w1, b1 = linear(k1, state_dim, 256)
    w2, b2 = linear(k2, 256, 128)
    wm, bm = linear(k3, 128, action_dim)
    ws, bs = linear(k4, 128, action_dim)
    return dict(w1=w1, b1=b1, w2=w2, b2=b2, wm=wm, bm=bm, ws=ws, bs=bs)


def actor_forward_ref_f32(state, p):
    """Pure f32 reference of the PyTorch module's forward."""
    h1 = jnp.maximum(state @ p["w1"] + p["b1"], 0.0)
    h2 = jnp.maximum(h1 @ p["w2"] + p["b2"], 0.0)
    mean = h2 @ p["wm"] + p["bm"]
    log_std = jnp.clip(h2 @ p["ws"] + p["bs"], LOG_STD_MIN, LOG_STD_MAX)
    return mean, log_std


def actor_forward_ref_bf16(state, prep):
    """Reference using the exact bf16 weights the kernel sees (tight check)."""
    a = prep["action_dim"]
    h1 = jnp.dot(state.astype(jnp.bfloat16), prep["w1"],
                 preferred_element_type=jnp.float32) + prep["b1"]
    h1 = jnp.maximum(h1, 0.0)
    h2 = jnp.dot(h1.astype(jnp.bfloat16), prep["w2"],
                 preferred_element_type=jnp.float32) + prep["b2"]
    h2 = jnp.maximum(h2, 0.0)
    heads = jnp.dot(h2.astype(jnp.bfloat16), prep["wh"],
                    preferred_element_type=jnp.float32) + prep["bh"]
    mean = heads[:, :a]
    log_std = jnp.clip(heads[:, a:2 * a], LOG_STD_MIN, LOG_STD_MAX)
    return mean, log_std


if __name__ == "__main__":
    key = jax.random.PRNGKey(0)
    k_param, k_state = jax.random.split(key)

    batch = 8
    state_dim = 32
    action_dim = 8

    params = init_actor_params(k_param, state_dim, action_dim)
    prep = prepare_actor_params(params)
    state = jax.random.normal(k_state, (batch, state_dim), jnp.float32)

    mean, log_std = actor_forward(state, prep)
    mean = jax.block_until_ready(mean)
    log_std = jax.block_until_ready(log_std)

    assert mean.shape == (batch, action_dim)
    assert log_std.shape == (batch, action_dim)

    # Tight check: same bf16-weight math as the kernel.
    mean_b, log_std_b = actor_forward_ref_bf16(state, prep)
    assert jnp.allclose(mean, mean_b, atol=1e-3, rtol=1e-3)
    assert jnp.allclose(log_std, log_std_b, atol=1e-3, rtol=1e-3)

    # Loose check: original f32 module math (tolerance covers bf16 weight quantization).
    mean_f, log_std_f = actor_forward_ref_f32(state, params)
    assert jnp.allclose(mean, mean_f, atol=5e-2, rtol=5e-2)
    assert jnp.allclose(log_std, log_std_f, atol=5e-2, rtol=5e-2)
    assert bool(jnp.all(log_std <= LOG_STD_MAX)) and bool(jnp.all(log_std >= LOG_STD_MIN))

    # TODO(synk): sample_action / evaluate / get_action (Normal sampling, tanh squash)
    # are host-side utilities outside forward(); not implemented as kernels.

    print("KERNEL_OK")
</pallas_src>

<mosaic_0001>
module attributes {stable_mosaic.version = 11 : i64} {
  func.func @_actor_kernel(%arg0: i32, %arg1: memref<8x32xf32, #tpu.memory_space<vmem>>, %arg2: memref<32x256xbf16, #tpu.memory_space<vmem>>, %arg3: memref<1x256xf32, #tpu.memory_space<vmem>>, %arg4: memref<256x128xbf16, #tpu.memory_space<vmem>>, %arg5: memref<1x128xf32, #tpu.memory_space<vmem>>, %arg6: memref<128x128xbf16, #tpu.memory_space<vmem>>, %arg7: memref<1x128xf32, #tpu.memory_space<vmem>>, %arg8: memref<8x128xf32, #tpu.memory_space<vmem>>) attributes {dimension_semantics = [#tpu.dimension_semantics<parallel>], iteration_bounds = array<i64: 1>, scalar_prefetch = 0 : i64, scratch_operands = 0 : i64, tpu.core_type = #tpu.core_type<tc>, window_params = [{transform_indices = @transform_0, window_bounds = array<i64: 8, 32>}, {pipeline_mode = #tpu.pipeline_mode<synchronous>, transform_indices = @transform_1, window_bounds = array<i64: 32, 256>}, {pipeline_mode = #tpu.pipeline_mode<synchronous>, transform_indices = @transform_2, window_bounds = array<i64: 1, 256>}, {pipeline_mode = #tpu.pipeline_mode<synchronous>, transform_indices = @transform_3, window_bounds = array<i64: 256, 128>}, {pipeline_mode = #tpu.pipeline_mode<synchronous>, transform_indices = @transform_4, window_bounds = array<i64: 1, 128>}, {pipeline_mode = #tpu.pipeline_mode<synchronous>, transform_indices = @transform_5, window_bounds = array<i64: 128, 128>}, {pipeline_mode = #tpu.pipeline_mode<synchronous>, transform_indices = @transform_6, window_bounds = array<i64: 1, 128>}, {transform_indices = @transform_7, window_bounds = array<i64: 8, 128>}]} {
    %c0 = arith.constant 0 : index
    %c0_0 = arith.constant 0 : index
    %0 = vector.load %arg1[%c0, %c0_0] : memref<8x32xf32, #tpu.memory_space<vmem>>, vector<8x32xf32>
    %1 = arith.truncf %0 : vector<8x32xf32> to vector<8x32xbf16>
    %c0_1 = arith.constant 0 : index
    %c0_2 = arith.constant 0 : index
    %2 = vector.load %arg2[%c0_1, %c0_2] : memref<32x256xbf16, #tpu.memory_space<vmem>>, vector<32x256xbf16>
    %cst = arith.constant dense<0.000000e+00> : vector<8x256xf32>
    %3 = tpu.matmul %1, %2, %cst {dimension_numbers = #tpu.dot_dimension_numbers<[1], [0], [0], [1], [0, 0, 1, 1], [], []>} : vector<8x32xbf16>, vector<32x256xbf16>, vector<8x256xf32> -> vector<8x256xf32>
    %c0_3 = arith.constant 0 : index
    %c0_4 = arith.constant 0 : index
    %4 = vector.load %arg3[%c0_3, %c0_4] : memref<1x256xf32, #tpu.memory_space<vmem>>, vector<1x256xf32>
    %5 = vector.broadcast %4 : vector<1x256xf32> to vector<8x256xf32>
    %6 = arith.addf %3, %5 : vector<8x256xf32>
    %cst_5 = arith.constant 0.000000e+00 : f32
    %7 = vector.broadcast %cst_5 : f32 to vector<8x256xf32>
    %8 = arith.maximumf %6, %7 : vector<8x256xf32>
    %9 = arith.truncf %8 : vector<8x256xf32> to vector<8x256xbf16>
    %c0_6 = arith.constant 0 : index
    %c0_7 = arith.constant 0 : index
    %10 = vector.load %arg4[%c0_6, %c0_7] : memref<256x128xbf16, #tpu.memory_space<vmem>>, vector<256x128xbf16>
    %cst_8 = arith.constant dense<0.000000e+00> : vector<8x128xf32>
    %11 = tpu.matmul %9, %10, %cst_8 {dimension_numbers = #tpu.dot_dimension_numbers<[1], [0], [0], [1], [0, 0, 1, 1], [], []>} : vector<8x256xbf16>, vector<256x128xbf16>, vector<8x128xf32> -> vector<8x128xf32>
    %c0_9 = arith.constant 0 : index
    %c0_10 = arith.constant 0 : index
    %12 = vector.load %arg5[%c0_9, %c0_10] : memref<1x128xf32, #tpu.memory_space<vmem>>, vector<1x128xf32>
    %13 = vector.broadcast %12 : vector<1x128xf32> to vector<8x128xf32>
    %14 = arith.addf %11, %13 : vector<8x128xf32>
    %cst_11 = arith.constant 0.000000e+00 : f32
    %15 = vector.broadcast %cst_11 : f32 to vector<8x128xf32>
    %16 = arith.maximumf %14, %15 : vector<8x128xf32>
    %17 = arith.truncf %16 : vector<8x128xf32> to vector<8x128xbf16>
    %c0_12 = arith.constant 0 : index
    %c0_13 = arith.constant 0 : index
    %18 = vector.load %arg6[%c0_12, %c0_13] : memref<128x128xbf16, #tpu.memory_space<vmem>>, vector<128x128xbf16>
    %cst_14 = arith.constant dense<0.000000e+00> : vector<8x128xf32>
    %19 = tpu.matmul %17, %18, %cst_14 {dimension_numbers = #tpu.dot_dimension_numbers<[1], [0], [0], [1], [0, 0, 1, 1], [], []>} : vector<8x128xbf16>, vector<128x128xbf16>, vector<8x128xf32> -> vector<8x128xf32>
    %c0_15 = arith.constant 0 : index
    %c0_16 = arith.constant 0 : index
    %20 = vector.load %arg7[%c0_15, %c0_16] : memref<1x128xf32, #tpu.memory_space<vmem>>, vector<1x128xf32>
    %21 = vector.broadcast %20 : vector<1x128xf32> to vector<8x128xf32>
    %22 = arith.addf %19, %21 : vector<8x128xf32>
    %23 = tpu.iota {dimensions = array<i32: 1>} : vector<8x128xi32>
    %c8_i32 = arith.constant 8 : i32
    %24 = vector.broadcast %c8_i32 : i32 to vector<8x128xi32>
    %25 = arith.cmpi sge, %23, %24 : vector<8x128xi32>
    %c16_i32 = arith.constant 16 : i32
    %26 = vector.broadcast %c16_i32 : i32 to vector<8x128xi32>
    %27 = arith.cmpi slt, %23, %26 : vector<8x128xi32>
    %28 = arith.andi %25, %27 : vector<8x128xi1>
    %cst_17 = arith.constant -2.000000e+01 : f32
    %cst_18 = arith.constant 2.000000e+00 : f32
    %29 = vector.broadcast %cst_17 : f32 to vector<8x128xf32>
    %30 = arith.maximumf %29, %22 : vector<8x128xf32>
    %31 = vector.broadcast %cst_18 : f32 to vector<8x128xf32>
    %32 = arith.minimumf %31, %30 : vector<8x128xf32>
    %33 = arith.select %28, %32, %22 : vector<8x128xi1>, vector<8x128xf32>
    %c0_19 = arith.constant 0 : index
    %c0_20 = arith.constant 0 : index
    %34 = vector.load %arg8[%c0_19, %c0_20] : memref<8x128xf32, #tpu.memory_space<vmem>>, vector<8x128xf32>
    tpu.vector_store %arg8[%c0_19, %c0_20], %33 {strides = array<i32>} : memref<8x128xf32, #tpu.memory_space<vmem>>, vector<8x128xf32>,
    return
  }
  func.func @transform_0(%arg0: i32) -> (i32, i32) {
    %c0_i32 = arith.constant 0 : i32
    %c0_i32_0 = arith.constant 0 : i32
    return %arg0, %c0_i32 : i32, i32
  }
  func.func @transform_1(%arg0: i32) -> (i32, i32) {
    %c0_i32 = arith.constant 0 : i32
    %c0_i32_0 = arith.constant 0 : i32
    %c0_i32_1 = arith.constant 0 : i32
    return %c0_i32, %c0_i32_0 : i32, i32
  }
  func.func @transform_2(%arg0: i32) -> (i32, i32) {
    %c0_i32 = arith.constant 0 : i32
    %c0_i32_0 = arith.constant 0 : i32
    %c0_i32_1 = arith.constant 0 : i32
    return %c0_i32, %c0_i32_0 : i32, i32
  }
  func.func @transform_3(%arg0: i32) -> (i32, i32) {
    %c0_i32 = arith.constant 0 : i32
    %c0_i32_0 = arith.constant 0 : i32
    %c0_i32_1 = arith.constant 0 : i32
    return %c0_i32, %c0_i32_0 : i32, i32
  }
  func.func @transform_4(%arg0: i32) -> (i32, i32) {
    %c0_i32 = arith.constant 0 : i32
    %c0_i32_0 = arith.constant 0 : i32
    %c0_i32_1 = arith.constant 0 : i32
    return %c0_i32, %c0_i32_0 : i32, i32
  }
  func.func @transform_5(%arg0: i32) -> (i32, i32) {
    %c0_i32 = arith.constant 0 : i32
    %c0_i32_0 = arith.constant 0 : i32
    %c0_i32_1 = arith.constant 0 : i32
    return %c0_i32, %c0_i32_0 : i32, i32
  }
  func.func @transform_6(%arg0: i32) -> (i32, i32) {
    %c0_i32 = arith.constant 0 : i32
    %c0_i32_0 = arith.constant 0 : i32
    %c0_i32_1 = arith.constant 0 : i32
    return %c0_i32, %c0_i32_0 : i32, i32
  }
  func.func @transform_7(%arg0: i32) -> (i32, i32) {
    %c0_i32 = arith.constant 0 : i32
    %c0_i32_0 = arith.constant 0 : i32
    return %arg0, %c0_i32 : i32, i32
  }
}

</mosaic_0001>

<llo_original>
// kernel: tpu_custom_call.1
$region0: #{tpu_custom_call.1}
  #allocation0 [shape = 'u32[]', space=smem, size = 0x4, offset = 0x4, fixed_abs, tag = 'smem constant byte address 0x4 - core index']
  #allocation1 [shape = 'u32[72,128]{1,0:T(1,128)}', space=vmem, size = 0x9000, scoped, tag = 'internal scratch']
  %s0 = inlined_call_operand.hbm [shape: f32[8,32], index: 0, kind: input, shape index: {}]
  %s1 = inlined_call_operand.hbm [shape: bf16[32,256], index: 1, kind: input, shape index: {}]
  %s2 = inlined_call_operand.hbm [shape: f32[1,256], index: 2, kind: input, shape index: {}]
  %s3 = inlined_call_operand.hbm [shape: bf16[256,128], index: 3, kind: input, shape index: {}]
  %s4 = inlined_call_operand.vmem [shape: f32[1,128], index: 4, kind: input, shape index: {}]
  %s5 = inlined_call_operand.hbm [shape: bf16[128,128], index: 5, kind: input, shape index: {}]
  %s6 = inlined_call_operand.vmem [shape: f32[1,128], index: 6, kind: input, shape index: {}]
  %s7 = inlined_call_operand.hbm [shape: f32[8,128], index: 7, kind: output, shape index: {}]
  %s8 = sld [smem:[#allocation0]]
  $region58: #{tpu_custom_call.1} parent=0
    _
  %s10 = ssub.s32 1, %s8
  %s11 = scalar_select 0, %s10, %s8
  $region1: #{tpu_custom_call.1} parent=0
    #allocation2 [shape = 'u8[4096]{0}', space=vmem, size = 0x1000, scoped, tag = 'input window, operand 0, single buffered']
    #allocation3 [shape = 's32[1]{0}', space=sflag, size = 0x4, scoped, tag = 'scoped memory for tpu_custom_call.1']
    #allocation4 [shape = 's32[1]{0}', space=sflag, size = 0x4, scoped, tag = 'scoped memory for tpu_custom_call.1']
    #allocation5 [shape = 'u8[16384]{0}', space=vmem, size = 0x4000, scoped, tag = 'input window, operand 1, single buffered']
    #allocation6 [shape = 's32[1]{0}', space=sflag, size = 0x4, scoped, tag = 'scoped memory for tpu_custom_call.1']
    #allocation7 [shape = 'u8[1024]{0}', space=vmem, size = 0x400, scoped, tag = 'input window, operand 2, single buffered']
    #allocation8 [shape = 'u8[65536]{0}', space=vmem, size = 0x10000, scoped, tag = 'input window, operand 3, single buffered']
    #allocation9 [shape = 's32[1]{0}', space=sflag, size = 0x4, scoped, tag = 'scoped memory for tpu_custom_call.1']
    #allocation10 [shape = 'u8[32768]{0}', space=vmem, size = 0x8000, scoped, tag = 'input window, operand 5, single buffered']
    #allocation11 [shape = 'u8[4096]{0}', space=vmem, size = 0x1000, scoped, tag = 'output window, operand 0, single buffered']
    %12 = vsyncpa [#allocation3], 0
    %13 = vsyncpa [#allocation6], 0
    %14 = vsyncpa [#allocation9], 0
    %15 = vsyncpa [#allocation4], 0
    // Predicated region
    $region2: #{tpu_custom_call.1} parent=1 // pred_check
      _
    $region3: #{tpu_custom_call.1} parent=1 // pred_check_branch
      %17 = sbr.rel (0) target = $region5
    $region4: #{tpu_custom_call.1} parent=1 // pred_region
      %19 = vsyncadd [#allocation3], 0
      %s21 = sshll.u32 %s0, 4
      %s22 = int_to_ptr.hbm [resolvable:$true] %s21
      %s23 = sshll.u32 [#allocation2], 4
      %s24 = int_to_ptr.vmem [resolvable:$true] %s23
      %26 = dma.hbm_to_vmem [thread:$0]  %s22, 128, %s24, [#allocation3]
    $region5: #{tpu_custom_call.1} parent=1 // pred_fallthru
      _
    // Predicated region
    $region6: #{tpu_custom_call.1} parent=1 // pred_check
      _
    $region7: #{tpu_custom_call.1} parent=1 // pred_check_branch
      %28 = sbr.rel (0) target = $region9
    $region8: #{tpu_custom_call.1} parent=1 // pred_region
      %30 = vsyncadd [#allocation6], 0
      %s31 = sshll.u32 %s1, 4
      %s32 = int_to_ptr.hbm [resolvable:$true] %s31
      %s33 = sshll.u32 [#allocation5], 4
      %s34 = int_to_ptr.vmem [resolvable:$true] %s33
      %39 = dma.hbm_to_vmem [thread:$0]  %s32, 512, %s34, [#allocation6], 128, 128, 8
    $region9: #{tpu_custom_call.1} parent=1 // pred_fallthru
      _
    // Predicated region
    $region10: #{tpu_custom_call.1} parent=1 // pred_check
      _
    $region11: #{tpu_custom_call.1} parent=1 // pred_check_branch
      %41 = sbr.rel (0) target = $region13
    $region12: #{tpu_custom_call.1} parent=1 // pred_region
      %43 = vsyncadd [#allocation6], 0
      %s45 = sshll.u32 %s2, 4
      %s46 = int_to_ptr.hbm [resolvable:$true] %s45
      %s47 = sshll.u32 [#allocation7], 4
      %s48 = int_to_ptr.vmem [resolvable:$true] %s47
      %50 = dma.hbm_to_vmem [thread:$0]  %s46, 32, %s48, [#allocation6]
    $region13: #{tpu_custom_call.1} parent=1 // pred_fallthru
      _
    // Predicated region
    $region14: #{tpu_custom_call.1} parent=1 // pred_check
      _
    $region15: #{tpu_custom_call.1} parent=1 // pred_check_branch
      %52 = sbr.rel (0) target = $region17
    $region16: #{tpu_custom_call.1} parent=1 // pred_region
      %54 = vsyncadd [#allocation9], 0
      %s55 = sshll.u32 %s3, 4
      %s56 = int_to_ptr.hbm [resolvable:$true] %s55
      %s57 = sshll.u32 [#allocation8], 4
      %s58 = int_to_ptr.vmem [resolvable:$true] %s57
      %63 = dma.hbm_to_vmem [thread:$0]  %s56, 2048, %s58, [#allocation9], 64, 64, 4
    $region17: #{tpu_custom_call.1} parent=1 // pred_fallthru
      _
    // Predicated region
    $region18: #{tpu_custom_call.1} parent=1 // pred_check
      _
    $region19: #{tpu_custom_call.1} parent=1 // pred_check_branch
      %65 = sbr.rel (0) target = $region21
    $region20: #{tpu_custom_call.1} parent=1 // pred_region
      _
    $region21: #{tpu_custom_call.1} parent=1 // pred_fallthru
      _
    // Predicated region
    $region22: #{tpu_custom_call.1} parent=1 // pred_check
      _
    $region23: #{tpu_custom_call.1} parent=1 // pred_check_branch
      %67 = sbr.rel (0) target = $region25
    $region24: #{tpu_custom_call.1} parent=1 // pred_region
      %69 = vsyncadd [#allocation9], 0
      %s70 = sshll.u32 %s5, 4
      %s71 = int_to_ptr.hbm [resolvable:$true] %s70
      %s72 = sshll.u32 [#allocation10], 4
      %s73 = int_to_ptr.vmem [resolvable:$true] %s72
      %78 = dma.hbm_to_vmem [thread:$0]  %s71, 1024, %s73, [#allocation9], 64, 64, 4
    $region25: #{tpu_custom_call.1} parent=1 // pred_fallthru
      _
    // Predicated region
    $region26: #{tpu_custom_call.1} parent=1 // pred_check
      _
    $region27: #{tpu_custom_call.1} parent=1 // pred_check_branch
      %80 = sbr.rel (0) target = $region29
    $region28: #{tpu_custom_call.1} parent=1 // pred_region
      _
    $region29: #{tpu_custom_call.1} parent=1 // pred_fallthru
      _
    // Predicated region
    $region30: #{tpu_custom_call.1} parent=1 // pred_check
      _
    $region31: #{tpu_custom_call.1} parent=1 // pred_check_branch
      %82 = sbr.rel (0) target = $region33
    $region32: #{tpu_custom_call.1} parent=1 // pred_region
      %84 = dma.done [#allocation3], 128
    $region33: #{tpu_custom_call.1} parent=1 // pred_fallthru
      _
    // Predicated region
    $region34: #{tpu_custom_call.1} parent=1 // pred_check
      _
    $region35: #{tpu_custom_call.1} parent=1 // pred_check_branch
      %86 = sbr.rel (0) target = $region37
    $region36: #{tpu_custom_call.1} parent=1 // pred_region
      %88 = dma.done [#allocation6], 512
    $region37: #{tpu_custom_call.1} parent=1 // pred_fallthru
      _
    // Predicated region
    $region38: #{tpu_custom_call.1} parent=1 // pred_check
      _
    $region39: #{tpu_custom_call.1} parent=1 // pred_check_branch
      %90 = sbr.rel (0) target = $region41
    $region40: #{tpu_custom_call.1} parent=1 // pred_region
      %92 = dma.done [#allocation6], 32
    $region41: #{tpu_custom_call.1} parent=1 // pred_fallthru
      _
    // Predicated region
    $region42: #{tpu_custom_call.1} parent=1 // pred_check
      _
    $region43: #{tpu_custom_call.1} parent=1 // pred_check_branch
      %94 = sbr.rel (0) target = $region45
    $region44: #{tpu_custom_call.1} parent=1 // pred_region
      %96 = dma.done [#allocation9], 2048
    $region45: #{tpu_custom_call.1} parent=1 // pred_fallthru
      _
    // Predicated region
    $region46: #{tpu_custom_call.1} parent=1 // pred_check
      _
    $region47: #{tpu_custom_call.1} parent=1 // pred_check_branch
      %98 = sbr.rel (0) target = $region49
    $region48: #{tpu_custom_call.1} parent=1 // pred_region
      %100 = dma.done [#allocation9], 1024
    $region49: #{tpu_custom_call.1} parent=1 // pred_fallthru
      _
    %v102 = vld [vmem:[#allocation2] sm:$0xff]
    %v103 = vpack.c.bf16 %v102, %v102
    %v104 = vld [vmem:[#allocation5] sm:$0xff]
    %v105 = vld [vmem:[#allocation5 + $0x8] sm:$0xff]
    %v106 = vld [vmem:[#allocation5 + $0x10] sm:$0xff]
    %v107 = vld [vmem:[#allocation5 + $0x18] sm:$0xff]
    %v108 = vld [vmem:[#allocation7] sm:$0x3]
    %v110 = vperm.slane %v108, 0
    %v111 = vperm.slane %v108, 1
    %v118 = vunpack.c.l.b16 %v104
    %v119 = vunpack.c.h.b16 %v104
    %v120 = vunpack.c.l.b16 %v105
    %v121 = vunpack.c.h.b16 %v105
    %v122 = vunpack.c.l.b16 %v106
    %v123 = vunpack.c.h.b16 %v106
    %v124 = vunpack.c.l.b16 %v107
    %v125 = vunpack.c.h.b16 %v107
    %v126 = vpack.c.b16 %v120, %v118
    %v127 = vpack.c.b16 %v121, %v119
    %v128 = vpack.c.b16 %v124, %v122
    %v129 = vpack.c.b16 %v125, %v123
    %vm134 = vcmask 261120
    %v136 = vsel %vm134, %v103, 0
    %138 = vmatpush.bf16.msra.mxu0 0
    %139 = vmatpush.bf16.msra.mxu0 0
    %140 = vmatpush.bf16.msra.mxu0 0
    %141 = vmatpush.bf16.msra.mxu0 0
    %142 = vmatpush.bf16.msra.mxu0 0
    %143 = vmatpush.bf16.msra.mxu0 0
    %144 = vmatpush.bf16.msra.mxu0 %v128
    %145 = vmatpush.bf16.msra.mxu0 %v126
    %146 = vmatmul.bf16.gmra.mxu0 %v136
    %v147 = vpop.f32.mrf.mxu0
    %v148 = vadd.f32 %v110, %v147
    %v149 = vpop.f32.mrf.mxu0
    %150 = vdwg.mxu0
    %151 = vmatpush.bf16.msra.mxu0 0
    %152 = vmatpush.bf16.msra.mxu0 0
    %153 = vmatpush.bf16.msra.mxu0 0
    %154 = vmatpush.bf16.msra.mxu0 0
    %155 = vmatpush.bf16.msra.mxu0 0
    %156 = vmatpush.bf16.msra.mxu0 0
    %157 = vmatpush.bf16.msra.mxu0 %v129
    %158 = vmatpush.bf16.msra.mxu0 %v127
    %159 = vmatmul.bf16.gmra.mxu0 %v136
    %v160 = vpop.f32.mrf.mxu0
    %v161 = vadd.f32 %v111, %v160
    %v162 = vpop.f32.mrf.mxu0
    %163 = vdwg.mxu0
    %v164 = vmax.f32 %v148, 0.0
    %v165 = vmax.f32 %v161, 0.0
    %v166 = vpack.c.bf16 %v164, %v164
    %v167 = vpack.c.bf16 %v165, %v165
    %v168 = vld [vmem:[#allocation8] sm:$0xf]
    %v169 = vld [vmem:[#allocation8 + $0x4] sm:$0xf]
    %v170 = vld [vmem:[#allocation8 + $0x8] sm:$0xf]
    %v171 = vld [vmem:[#allocation8 + $0xc] sm:$0xf]
    %v172 = vld [vmem:[#allocation8 + $0x10] sm:$0xf]
    %v173 = vld [vmem:[#allocation8 + $0x14] sm:$0xf]
    %v174 = vld [vmem:[#allocation8 + $0x18] sm:$0xf]
    %v175 = vld [vmem:[#allocation8 + $0x1c] sm:$0xf]
    %v176 = vld [vmem:[#allocation8 + $0x20] sm:$0xf]
    %v177 = vld [vmem:[#allocation8 + $0x24] sm:$0xf]
    %v178 = vld [vmem:[#allocation8 + $0x28] sm:$0xf]
    %v179 = vld [vmem:[#allocation8 + $0x2c] sm:$0xf]
    %v180 = vld [vmem:[#allocation8 + $0x30] sm:$0xf]
    %v181 = vld [vmem:[#allocation8 + $0x34] sm:$0xf]
    %v182 = vld [vmem:[#allocation8 + $0x38] sm:$0xf]
    %v183 = vld [vmem:[#allocation8 + $0x3c] sm:$0xf]
    %v184 = vld [vmem:[#allocation8 + $0x40] sm:$0xf]
    %v185 = vld [vmem:[#allocation8 + $0x44] sm:$0xf]
    %v186 = vld [vmem:[#allocation8 + $0x48] sm:$0xf]
    %v187 = vld [vmem:[#allocation8 + $0x4c] sm:$0xf]
    %v188 = vld [vmem:[#allocation8 + $0x50] sm:$0xf]
    %v189 = vld [vmem:[#allocation8 + $0x54] sm:$0xf]
    %v190 = vld [vmem:[#allocation8 + $0x58] sm:$0xf]
    %v191 = vld [vmem:[#allocation8 + $0x5c] sm:$0xf]
    %v192 = vld [vmem:[#allocation8 + $0x60] sm:$0xf]
    %v193 = vld [vmem:[#allocation8 + $0x64] sm:$0xf]
    %v194 = vld [vmem:[#allocation8 + $0x68] sm:$0xf]
    %v195 = vld [vmem:[#allocation8 + $0x6c] sm:$0xf]
    %v196 = vld [vmem:[#allocation8 + $0x70] sm:$0xf]
    %v197 = vld [vmem:[#allocation8 + $0x74] sm:$0xf]
    %v198 = vld [vmem:[#allocation8 + $0x78] sm:$0xf]
    %v199 = vld [vmem:[#allocation8 + $0x7c] sm:$0xf]
    %v200 = vld [vmem:[%s4] sm:$0x1]
    %v202 = vperm.slane %v200, 0
    %v236 = vunpack.c.l.b16 %v168
    %v237 = vunpack.c.l.b16 %v169
    %v238 = vunpack.c.l.b16 %v170
    %v239 = vunpack.c.l.b16 %v171
    %v240 = vunpack.c.l.b16 %v172
    %v241 = vunpack.c.l.b16 %v173
    %v242 = vunpack.c.l.b16 %v174
    %v243 = vunpack.c.l.b16 %v175
    %v244 = vunpack.c.l.b16 %v176
    %v245 = vunpack.c.l.b16 %v177
    %v246 = vunpack.c.l.b16 %v178
    %v247 = vunpack.c.l.b16 %v179
    %v248 = vunpack.c.l.b16 %v180
    %v249 = vunpack.c.l.b16 %v181
    %v250 = vunpack.c.l.b16 %v182
    %v251 = vunpack.c.l.b16 %v183
    %v252 = vunpack.c.l.b16 %v184
    %v253 = vunpack.c.l.b16 %v185
    %v254 = vunpack.c.l.b16 %v186
    %v255 = vunpack.c.l.b16 %v187
    %v256 = vunpack.c.l.b16 %v188
    %v257 = vunpack.c.l.b16 %v189
    %v258 = vunpack.c.l.b16 %v190
    %v259 = vunpack.c.l.b16 %v191
    %v260 = vunpack.c.l.b16 %v192
    %v261 = vunpack.c.l.b16 %v193
    %v262 = vunpack.c.l.b16 %v194
    %v263 = vunpack.c.l.b16 %v195
    %v264 = vunpack.c.l.b16 %v196
    %v265 = vunpack.c.l.b16 %v197
    %v266 = vunpack.c.l.b16 %v198
    %v267 = vunpack.c.l.b16 %v199
    %v268 = vpack.c.b16 %v237, %v236
    %v269 = vpack.c.b16 %v239, %v238
    %v270 = vpack.c.b16 %v241, %v240
    %v271 = vpack.c.b16 %v243, %v242
    %v272 = vpack.c.b16 %v245, %v244
    %v273 = vpack.c.b16 %v247, %v246
    %v274 = vpack.c.b16 %v249, %v248
    %v275 = vpack.c.b16 %v251, %v250
    %v276 = vpack.c.b16 %v253, %v252
    %v277 = vpack.c.b16 %v255, %v254
    %v278 = vpack.c.b16 %v257, %v256
    %v279 = vpack.c.b16 %v259, %v258
    %v280 = vpack.c.b16 %v261, %v260
    %v281 = vpack.c.b16 %v263, %v262
    %v282 = vpack.c.b16 %v265, %v264
    %v283 = vpack.c.b16 %v267, %v266
    %300 = vmatpush.bf16.msra.mxu0 %v275
    %301 = vmatpush.bf16.msra.mxu0 %v274
    %302 = vmatpush.bf16.msra.mxu0 %v273
    %303 = vmatpush.bf16.msra.mxu0 %v272
    %304 = vmatpush.bf16.msra.mxu0 %v271
    %305 = vmatpush.bf16.msra.mxu0 %v270
    %306 = vmatpush.bf16.msra.mxu0 %v269
    %307 = vmatpush.bf16.msra.mxu0 %v268
    %308 = vmatmul.bf16.gmra.mxu0 %v166
    %v309 = vpop.f32.mrf.mxu0
    %v310 = vadd.f32 %v202, %v309
    %v311 = vpop.f32.mrf.mxu0
    %312 = vdwg.mxu0
    %313 = vmatpush.bf16.msra.mxu0 %v283
    %314 = vmatpush.bf16.msra.mxu0 %v282
    %315 = vmatpush.bf16.msra.mxu0 %v281
    %316 = vmatpush.bf16.msra.mxu0 %v280
    %317 = vmatpush.bf16.msra.mxu0 %v279
    %318 = vmatpush.bf16.msra.mxu0 %v278
    %319 = vmatpush.bf16.msra.mxu0 %v277
    %320 = vmatpush.bf16.msra.mxu0 %v276
    %321 = vmatmul.bf16.gmra.mxu0 %v167
    %v322 = vpop.f32.mrf.mxu0
    %v323 = vadd.f32 %v310, %v322
    %v324 = vpop.f32.mrf.mxu0
    %325 = vdwg.mxu0
    %v326 = vmax.f32 %v323, 0.0
    %v327 = vpack.c.bf16 %v326, %v326
    %v328 = vld [vmem:[#allocation10] sm:$0xf]
    %v329 = vld [vmem:[#allocation10 + $0x4] sm:$0xf]
    %v330 = vld [vmem:[#allocation10 + $0x8] sm:$0xf]
    %v331 = vld [vmem:[#allocation10 + $0xc] sm:$0xf]
    %v332 = vld [vmem:[#allocation10 + $0x10] sm:$0xf]
    %v333 = vld [vmem:[#allocation10 + $0x14] sm:$0xf]
    %v334 = vld [vmem:[#allocation10 + $0x18] sm:$0xf]
    %v335 = vld [vmem:[#allocation10 + $0x1c] sm:$0xf]
    %v336 = vld [vmem:[#allocation10 + $0x20] sm:$0xf]
    %v337 = vld [vmem:[#allocation10 + $0x24] sm:$0xf]
    %v338 = vld [vmem:[#allocation10 + $0x28] sm:$0xf]
    %v339 = vld [vmem:[#allocation10 + $0x2c] sm:$0xf]
    %v340 = vld [vmem:[#allocation10 + $0x30] sm:$0xf]
    %v341 = vld [vmem:[#allocation10 + $0x34] sm:$0xf]
    %v342 = vld [vmem:[#allocation10 + $0x38] sm:$0xf]
    %v343 = vld [vmem:[#allocation10 + $0x3c] sm:$0xf]
    %v344 = vld [vmem:[%s6] sm:$0x1]
    %v346 = vperm.slane %v344, 0
    %v364 = vunpack.c.l.b16 %v328
    %v365 = vunpack.c.l.b16 %v329
    %v366 = vunpack.c.l.b16 %v330
    %v367 = vunpack.c.l.b16 %v331
    %v368 = vunpack.c.l.b16 %v332
    %v369 = vunpack.c.l.b16 %v333
    %v370 = vunpack.c.l.b16 %v334
    %v371 = vunpack.c.l.b16 %v335
    %v372 = vunpack.c.l.b16 %v336
    %v373 = vunpack.c.l.b16 %v337
    %v374 = vunpack.c.l.b16 %v338
    %v375 = vunpack.c.l.b16 %v339
    %v376 = vunpack.c.l.b16 %v340
    %v377 = vunpack.c.l.b16 %v341
    %v378 = vunpack.c.l.b16 %v342
    %v379 = vunpack.c.l.b16 %v343
    %v380 = vpack.c.b16 %v365, %v364
    %v381 = vpack.c.b16 %v367, %v366
    %v382 = vpack.c.b16 %v369, %v368
    %v383 = vpack.c.b16 %v371, %v370
    %v384 = vpack.c.b16 %v373, %v372
    %v385 = vpack.c.b16 %v375, %v374
    %v386 = vpack.c.b16 %v377, %v376
    %v387 = vpack.c.b16 %v379, %v378
    %396 = vmatpush.bf16.msra.mxu0 %v387
    %397 = vmatpush.bf16.msra.mxu0 %v386
    %398 = vmatpush.bf16.msra.mxu0 %v385
    %399 = vmatpush.bf16.msra.mxu0 %v384
    %400 = vmatpush.bf16.msra.mxu0 %v383
    %401 = vmatpush.bf16.msra.mxu0 %v382
    %402 = vmatpush.bf16.msra.mxu0 %v381
    %403 = vmatpush.bf16.msra.mxu0 %v380
    %404 = vmatmul.bf16.gmra.mxu0 %v327
    %v405 = vpop.f32.mrf.mxu0
    %v406 = vadd.f32 %v346, %v405
    %v407 = vpop.f32.mrf.mxu0
    %408 = vdwg.mxu0
    %v409 = vlaneseq
    %v410 = vand.u32 %v409, 127
    %vm411 = vcmp.ge.s32.totalorder %v410, 8
    %vm412 = vcmp.lt.s32.totalorder %v410, 16
    %vm413 = vmand %vm411, %vm412
    %v414 = vmax.f32 %v406, -20.0
    %v415 = vmin.f32 %v414, 2.0
    %v416 = vsel %vm413, %v415, %v406
    %417 = vst [vmem:[#allocation11] sm:$0xff] %v416
    // Predicated region
    $region50: #{tpu_custom_call.1} parent=1 // pred_check
      _
    $region51: #{tpu_custom_call.1} parent=1 // pred_check_branch
      %419 = sbr.rel (0) target = $region53
    $region52: #{tpu_custom_call.1} parent=1 // pred_region
      %421 = vsyncadd [#allocation4], 0
      %s423 = sshll.u32 [#allocation11], 4
      %s424 = int_to_ptr.vmem [resolvable:$true] %s423
      %s425 = sshll.u32 %s7, 4
      %s426 = int_to_ptr.hbm [resolvable:$true] %s425
      %428 = dma.vmem_to_hbm [thread:$0]  %s424, 128, %s426, [#allocation4]
    $region53: #{tpu_custom_call.1} parent=1 // pred_fallthru
      _
    // Predicated region
    $region54: #{tpu_custom_call.1} parent=1 // pred_check
      _
    $region55: #{tpu_custom_call.1} parent=1 // pred_check_branch
      %430 = sbr.rel (0) target = $region57
    $region56: #{tpu_custom_call.1} parent=1 // pred_region
      %432 = dma.done [#allocation4], 128
    $region57: #{tpu_custom_call.1} parent=1 // pred_fallthru
      _
    %433 = vsyncpa [#allocation3], 1
    %434 = vsyncpa [#allocation6], 1
    %435 = vsyncpa [#allocation9], 1
    %436 = vsyncpa [#allocation4], 1

</llo_original>
